<compile_context>
chip_gen: v7x
topology: tpu7x:2x2x1
jax: 0.10.0
libtpu: 0.0.40
codegen_flags: <defaults>
</compile_context>

<pallas_src>
import functools

import jax
import jax.numpy as jnp
from jax.experimental import pallas as pl
from jax.experimental.pallas import tpu as pltpu


def _gcn_fused_kernel(a_ref, x_ref, params_ref, o_ref, *, layer_dims, inv_n):
    """Fused GCN forward (all layers + ReLU + mean-node pooling).

    a_ref      : [N, N]  bf16 normalized adjacency D^-1/2 A D^-1/2
    x_ref      : [N, F_in] f32 node features
    params_ref : [R, 128] f32 packed parameter slab
                 (per layer: W_l rows then one bias row, concatenated)
    o_ref      : [1, out_feats] f32
    """
    a_bf = a_ref[...]                      # bf16, stays bf16 for the MXU
    slab = params_ref[...]                 # f32
    h = x_ref[...]                         # f32

    num_layers = len(layer_dims)
    row = 0
    for l, (f_in, f_out) in enumerate(layer_dims):
        w = slab[row:row + f_in, :f_out]               # [f_in, f_out] f32
        b = slab[row + f_in:row + f_in + 1, :f_out]    # [1, f_out]   f32
        row += f_in + 1

        if l < num_layers - 1:
            # Hidden layer: aggregate / transform on the MXU (bf16 operands,
            # f32 accumulation), f32 bias + ReLU epilogue (VPU-safe on v5e).
            h_bf = h.astype(jnp.bfloat16)
            if f_in <= f_out:
                # Aggregate first: (A @ H) @ W (cheaper when features widen).
                agg = jnp.dot(a_bf, h_bf, preferred_element_type=jnp.float32)
                z = jnp.dot(agg, w, preferred_element_type=jnp.float32)
            else:
                # Transform first: A @ (H @ W) (cheaper when features narrow).
                hw = jnp.dot(h, w, preferred_element_type=jnp.float32)
                z = jnp.dot(a_bf, hw.astype(jnp.bfloat16),
                            preferred_element_type=jnp.float32)
            h = jnp.maximum(z + b, 0.0)
        else:
            # Last layer fused with mean-node pooling, pool-first, all f32:
            #   mean_n( A (H W) + b ) = ((1/N) 1^T A) @ H @ W + b
            p = jnp.sum(a_bf.astype(jnp.float32), axis=0, keepdims=True) * inv_n
            ph = jnp.dot(p, h, preferred_element_type=jnp.float32)     # [1, f_in]
            o_ref[...] = jnp.dot(ph, w, preferred_element_type=jnp.float32) + b


def normalize_adjacency(adj):
    """Plain-JAX glue: D^{-1/2} A D^{-1/2} (GraphConv norm='both'), f32.

    Note: DGL raises on 0-in-degree nodes by default; here they map to zero
    rows instead (no isolated nodes in this example graph).
    """
    deg = jnp.sum(adj, axis=1)
    inv_sqrt = jnp.where(deg > 0, 1.0 / jnp.sqrt(deg), 0.0)
    return inv_sqrt[:, None] * adj * inv_sqrt[None, :]


def init_gcn_params(key, in_feats, hidden_size, out_feats, num_layers):
    dims = [in_feats] + [hidden_size] * (num_layers - 1) + [out_feats]
    params = []
    for i in range(num_layers):
        key, kw = jax.random.split(key)
        fan_in, fan_out = dims[i], dims[i + 1]
        scale = jnp.sqrt(6.0 / (fan_in + fan_out))  # xavier-uniform like GraphConv
        w = jax.random.uniform(kw, (fan_in, fan_out), jnp.float32, -scale, scale)
        b = jnp.zeros((1, fan_out), jnp.float32)
        params.append((w, b))
    return params


def pack_params(params):
    """Pack all (W_l, b_l) into one lane-dense [rows, 128k] f32 slab.

    Per layer: W_l rows followed by one bias row, columns zero-padded to a
    128-multiple; layers concatenated along rows (rows padded to 8-multiple).
    Returns (slab, layer_dims) with static layer_dims for in-kernel slicing.
    """
    max_out = max(w.shape[1] for w, _ in params)
    pad_cols = 128 * pl.cdiv(max_out, 128)
    blocks, layer_dims = [], []
    for w, b in params:
        f_in, f_out = w.shape
        layer_dims.append((f_in, f_out))
        blk = jnp.concatenate([w, b], axis=0)                       # [f_in+1, f_out]
        blk = jnp.pad(blk, ((0, 0), (0, pad_cols - f_out)))
        blocks.append(blk)
    slab = jnp.concatenate(blocks, axis=0)
    rows = slab.shape[0]
    slab = jnp.pad(slab, ((0, 8 * pl.cdiv(rows, 8) - rows), (0, 0)))
    return slab, tuple(layer_dims)


@functools.partial(jax.jit, static_argnames=("layer_dims",))
def gcn_forward(a_norm_bf16, features, params_slab, layer_dims):
    """Whole GCN forward as ONE fused pallas_call (3 input DMAs total)."""
    n = features.shape[0]
    out_feats = layer_dims[-1][1]

    # Advisory cost estimate for the fused call.
    flops = 0
    for l, (f_in, f_out) in enumerate(layer_dims):
        if l < len(layer_dims) - 1:
            flops += 2 * n * n * min(f_in, f_out) + 2 * n * f_in * f_out
        else:
            flops += n * n + 2 * n * f_in + 2 * f_in * f_out
    bytes_accessed = (2 * a_norm_bf16.size + 4 * features.size
                      + 4 * params_slab.size + 4 * out_feats)

    kernel = functools.partial(_gcn_fused_kernel,
                               layer_dims=layer_dims, inv_n=1.0 / n)

    return pl.pallas_call(
        kernel,
        out_shape=jax.ShapeDtypeStruct((1, out_feats), jnp.float32),
        # Tiny graph: keep every operand fully resident in VMEM (no grid).
        in_specs=[pl.BlockSpec(memory_space=pltpu.MemorySpace.VMEM)] * 3,
        out_specs=pl.BlockSpec(memory_space=pltpu.MemorySpace.VMEM),
        cost_estimate=pl.CostEstimate(
            flops=flops, transcendentals=0, bytes_accessed=bytes_accessed),
    )(a_norm_bf16, features, params_slab)


def gcn_reference(a_norm_f32, features, params):
    """Pure-JAX f32 reference (for correctness sanity check)."""
    x = features
    for w, b in params[:-1]:
        x = jnp.maximum(a_norm_f32 @ (x @ w) + b, 0.0)
    w, b = params[-1]
    x = a_norm_f32 @ (x @ w) + b
    return jnp.mean(x, axis=0, keepdims=True)


if __name__ == "__main__":
    key = jax.random.PRNGKey(0)

    # Small molecule-like graph: N nodes, ring topology + a few extra bonds.
    N = 16
    in_feats, hidden_size, out_feats, num_layers = 4, 32, 1, 3

    src = jnp.arange(N)
    dst = (src + 1) % N
    adj = jnp.zeros((N, N), jnp.float32)
    adj = adj.at[src, dst].set(1.0).at[dst, src].set(1.0)      # ring (undirected)
    for i, j in [(0, 8), (3, 11), (5, 13)]:                     # a few chords
        adj = adj.at[i, j].set(1.0).at[j, i].set(1.0)

    a_norm_f32 = normalize_adjacency(adj)
    a_norm_bf16 = a_norm_f32.astype(jnp.bfloat16)   # kernel operand (half DMA bytes)

    key, kf = jax.random.split(key)
    features = jax.random.normal(kf, (N, in_feats), jnp.float32)

    params = init_gcn_params(key, in_feats, hidden_size, out_feats, num_layers)
    params_slab, layer_dims = pack_params(params)

    pooled = gcn_forward(a_norm_bf16, features, params_slab, layer_dims)
    jax.block_until_ready(pooled)
    assert pooled.shape == (1, out_feats)

    # Sanity check vs pure-JAX f32 reference. Remaining error sources are bf16
    # A_norm / bf16 H on the MXU (f32 accumulation, f32 epilogue & pooling).
    ref = gcn_reference(a_norm_f32, features, params)
    assert jnp.allclose(pooled, ref, rtol=5e-2, atol=1e-2), (pooled, ref)

    print("KERNEL_OK")
</pallas_src>

<mosaic_0001>
module attributes {stable_mosaic.version = 11 : i64} {
  func.func @_gcn_fused_kernel(%arg0: memref<16x16xbf16, #tpu.memory_space<vmem>>, %arg1: memref<16x4xf32, #tpu.memory_space<vmem>>, %arg2: memref<72x128xf32, #tpu.memory_space<vmem>>, %arg3: memref<1x1xf32, #tpu.memory_space<vmem>>) attributes {dimension_semantics = [], scalar_prefetch = 0 : i64, scratch_operands = 0 : i64, tpu.core_type = #tpu.core_type<tc>} {
    %c0 = arith.constant 0 : index
    %c0_0 = arith.constant 0 : index
    %0 = vector.load %arg0[%c0, %c0_0] : memref<16x16xbf16, #tpu.memory_space<vmem>>, vector<16x16xbf16>
    %c0_1 = arith.constant 0 : index
    %c0_2 = arith.constant 0 : index
    %1 = vector.load %arg2[%c0_1, %c0_2] : memref<72x128xf32, #tpu.memory_space<vmem>>, vector<72x128xf32>
    %c0_3 = arith.constant 0 : index
    %c0_4 = arith.constant 0 : index
    %2 = vector.load %arg1[%c0_3, %c0_4] : memref<16x4xf32, #tpu.memory_space<vmem>>, vector<16x4xf32>
    %3 = vector.extract_strided_slice %1 {offsets = [0, 0], sizes = [4, 32], strides = [1, 1]} : vector<72x128xf32> to vector<4x32xf32>
    %4 = vector.extract_strided_slice %1 {offsets = [4, 0], sizes = [1, 32], strides = [1, 1]} : vector<72x128xf32> to vector<1x32xf32>
    %5 = arith.truncf %2 : vector<16x4xf32> to vector<16x4xbf16>
    %cst = arith.constant dense<0.000000e+00> : vector<16x4xf32>
    %6 = tpu.matmul %0, %5, %cst {dimension_numbers = #tpu.dot_dimension_numbers<[1], [0], [0], [1], [0, 0, 1, 1], [], []>} : vector<16x16xbf16>, vector<16x4xbf16>, vector<16x4xf32> -> vector<16x4xf32>
    %cst_5 = arith.constant dense<0.000000e+00> : vector<16x32xf32>
    %7 = tpu.matmul %6, %3, %cst_5 {dimension_numbers = #tpu.dot_dimension_numbers<[1], [0], [0], [1], [0, 0, 1, 1], [], []>} : vector<16x4xf32>, vector<4x32xf32>, vector<16x32xf32> -> vector<16x32xf32>
    %8 = vector.broadcast %4 : vector<1x32xf32> to vector<16x32xf32>
    %9 = arith.addf %7, %8 : vector<16x32xf32>
    %cst_6 = arith.constant 0.000000e+00 : f32
    %10 = vector.broadcast %cst_6 : f32 to vector<16x32xf32>
    %11 = arith.maximumf %9, %10 : vector<16x32xf32>
    %12 = vector.extract_strided_slice %1 {offsets = [5, 0], sizes = [32, 32], strides = [1, 1]} : vector<72x128xf32> to vector<32x32xf32>
    %13 = vector.extract_strided_slice %1 {offsets = [37, 0], sizes = [1, 32], strides = [1, 1]} : vector<72x128xf32> to vector<1x32xf32>
    %14 = arith.truncf %11 : vector<16x32xf32> to vector<16x32xbf16>
    %cst_7 = arith.constant dense<0.000000e+00> : vector<16x32xf32>
    %15 = tpu.matmul %0, %14, %cst_7 {dimension_numbers = #tpu.dot_dimension_numbers<[1], [0], [0], [1], [0, 0, 1, 1], [], []>} : vector<16x16xbf16>, vector<16x32xbf16>, vector<16x32xf32> -> vector<16x32xf32>
    %cst_8 = arith.constant dense<0.000000e+00> : vector<16x32xf32>
    %16 = tpu.matmul %15, %12, %cst_8 {dimension_numbers = #tpu.dot_dimension_numbers<[1], [0], [0], [1], [0, 0, 1, 1], [], []>} : vector<16x32xf32>, vector<32x32xf32>, vector<16x32xf32> -> vector<16x32xf32>
    %17 = vector.broadcast %13 : vector<1x32xf32> to vector<16x32xf32>
    %18 = arith.addf %16, %17 : vector<16x32xf32>
    %cst_9 = arith.constant 0.000000e+00 : f32
    %19 = vector.broadcast %cst_9 : f32 to vector<16x32xf32>
    %20 = arith.maximumf %18, %19 : vector<16x32xf32>
    %21 = vector.extract_strided_slice %1 {offsets = [38, 0], sizes = [32, 1], strides = [1, 1]} : vector<72x128xf32> to vector<32x1xf32>
    %22 = vector.extract_strided_slice %1 {offsets = [70, 0], sizes = [1, 1], strides = [1, 1]} : vector<72x128xf32> to vector<1x1xf32>
    %23 = arith.extf %0 : vector<16x16xbf16> to vector<16x16xf32>
    %cst_10 = arith.constant dense<0.000000e+00> : vector<16xf32>
    %24 = vector.multi_reduction <add>, %23, %cst_10 [0] : vector<16x16xf32> to vector<16xf32>
    %25 = vector.shape_cast %24 : vector<16xf32> to vector<1x16xf32>
    %cst_11 = arith.constant 6.250000e-02 : f32
    %26 = vector.broadcast %cst_11 : f32 to vector<1x16xf32>
    %27 = arith.mulf %25, %26 : vector<1x16xf32>
    %cst_12 = arith.constant dense<0.000000e+00> : vector<1x32xf32>
    %28 = tpu.matmul %27, %20, %cst_12 {dimension_numbers = #tpu.dot_dimension_numbers<[1], [0], [0], [1], [0, 0, 1, 1], [], []>} : vector<1x16xf32>, vector<16x32xf32>, vector<1x32xf32> -> vector<1x32xf32>
    %cst_13 = arith.constant dense<0.000000e+00> : vector<1x1xf32>
    %29 = tpu.matmul %28, %21, %cst_13 {dimension_numbers = #tpu.dot_dimension_numbers<[1], [0], [0], [1], [0, 0, 1, 1], [], []>} : vector<1x32xf32>, vector<32x1xf32>, vector<1x1xf32> -> vector<1x1xf32>
    %30 = arith.addf %29, %22 : vector<1x1xf32>
    %c0_14 = arith.constant 0 : index
    %c0_15 = arith.constant 0 : index
    %31 = vector.load %arg3[%c0_14, %c0_15] : memref<1x1xf32, #tpu.memory_space<vmem>>, vector<1x1xf32>
    tpu.vector_store %arg3[%c0_14, %c0_15], %30 {strides = array<i32>} : memref<1x1xf32, #tpu.memory_space<vmem>>, vector<1x1xf32>,
    return
  }
}

</mosaic_0001>

<llo_original>
// kernel: gcn_forward.1
$region0: #{gcn_forward.1}
  #allocation0 [shape = 'u32[]', space=smem, size = 0x4, offset = 0x4, fixed_abs, tag = 'smem constant byte address 0x4 - core index']
  #allocation1 [shape = 'u32[144,128]{1,0:T(1,128)}', space=vmem, size = 0x12000, scoped, tag = 'internal scratch']
  %s0 = inlined_call_operand.vmem [shape: bf16[16,16], index: 0, kind: input, shape index: {}]
  %s1 = inlined_call_operand.vmem [shape: f32[16,4], index: 1, kind: input, shape index: {}]
  %s2 = inlined_call_operand.hbm [shape: f32[72,128], index: 2, kind: input, shape index: {}]
  %s3 = inlined_call_operand.hbm [shape: f32[1,1], index: 3, kind: output, shape index: {}]
  %s4 = sld [smem:[#allocation0]]
  $region26: #{gcn_forward.1} parent=0
    _
  %s6 = ssub.s32 1, %s4
  %s7 = scalar_select 0, %s6, %s4
  $region1: #{gcn_forward.1} parent=0
    #allocation2 [shape = 'u8[36864]{0}', space=vmem, size = 0x9000, scoped, tag = 'input window, operand 2, single buffered']
    #allocation3 [shape = 's32[1]{0}', space=sflag, size = 0x4, scoped, tag = 'scoped memory for gcn_forward.1']
    #allocation4 [shape = 's32[1]{0}', space=sflag, size = 0x4, scoped, tag = 'scoped memory for gcn_forward.1']
    #allocation5 [shape = 'u8[512]{0}', space=vmem, size = 0x400, scoped, tag = 'output window, operand 0, single buffered']
    %8 = vsyncpa [#allocation3], 0
    %9 = vsyncpa [#allocation4], 0
    // Predicated region
    $region2: #{gcn_forward.1} parent=1 // pred_check
      _
    $region3: #{gcn_forward.1} parent=1 // pred_check_branch
      %11 = sbr.rel (0) target = $region5
    $region4: #{gcn_forward.1} parent=1 // pred_region
      _
    $region5: #{gcn_forward.1} parent=1 // pred_fallthru
      _
    // Predicated region
    $region6: #{gcn_forward.1} parent=1 // pred_check
      _
    $region7: #{gcn_forward.1} parent=1 // pred_check_branch
      %13 = sbr.rel (0) target = $region9
    $region8: #{gcn_forward.1} parent=1 // pred_region
      _
    $region9: #{gcn_forward.1} parent=1 // pred_fallthru
      _
    // Predicated region
    $region10: #{gcn_forward.1} parent=1 // pred_check
      _
    $region11: #{gcn_forward.1} parent=1 // pred_check_branch
      %15 = sbr.rel (0) target = $region13
    $region12: #{gcn_forward.1} parent=1 // pred_region
      %s17 = ssub.s32 1152, 1152
      %18 = vsyncadd [#allocation3], %s17
      %s19 = sshll.u32 [#allocation2], 4
      %s20 = int_to_ptr.vmem [resolvable:$true] %s19
      %25 = dma.hbm_to_vmem [thread:$0]  %s2, 1152, %s20, [#allocation3], 128, 128, 8
    $region13: #{gcn_forward.1} parent=1 // pred_fallthru
      _
    // Predicated region
    $region14: #{gcn_forward.1} parent=1 // pred_check
      _
    $region15: #{gcn_forward.1} parent=1 // pred_check_branch
      %27 = sbr.rel (0) target = $region17
    $region16: #{gcn_forward.1} parent=1 // pred_region
      %28 = dma.done [#allocation3], 1152
    $region17: #{gcn_forward.1} parent=1 // pred_fallthru
      _
    %v30 = vld [vmem:[%s0] sm:$0xf]
    %v31 = vld [vmem:[%s0 + $0x4] sm:$0xf]
    %v32 = vld [vmem:[#allocation2] sm:$0xff]
    %v33 = vld [vmem:[#allocation2 + $0x8] sm:$0xff]
    %v34 = vld [vmem:[#allocation2 + $0x10] sm:$0xff]
    %v35 = vld [vmem:[#allocation2 + $0x18] sm:$0xff]
    %v36 = vld [vmem:[#allocation2 + $0x20] sm:$0xff]
    %v37 = vld [vmem:[#allocation2 + $0x28] sm:$0xff]
    %v38 = vld [vmem:[#allocation2 + $0x30] sm:$0xff]
    %v39 = vld [vmem:[#allocation2 + $0x38] sm:$0xff]
    %v40 = vld [vmem:[#allocation2 + $0x40] sm:$0xff]
    %v41 = vld [vmem:[%s1] sm:$0xff]
    %v42 = vld [vmem:[%s1 + $0x8] sm:$0xff]
    %v43 = vpack.c.bf16 %v42, %v41
    %v46 = vunpack.c.l.b16 %v30
    %v47 = vunpack.c.l.b16 %v31
    %v48 = vpack.c.b16 %v47, %v46
    %vm49 = vcmask 130048
    %v51 = vsel %vm49, %v48, 0
    %53 = vmatprep.subr.bf16.mxu0 0
    %54 = vmatpush1.bf16.msra.mxu0 %v43
    %55 = vmatprep.subr.bf16.mxu0 0
    %56 = vmatpush1.bf16.msra.mxu0 0
    %57 = vmatprep.subr.bf16.mxu0 0
    %58 = vmatpush1.bf16.msra.mxu0 0
    %59 = vmatprep.subr.bf16.mxu0 0
    %60 = vmatpush1.bf16.msra.mxu0 0
    %61 = vmatprep.subr.bf16.mxu0 0
    %62 = vmatpush1.bf16.msra.mxu0 0
    %63 = vmatprep.subr.bf16.mxu0 0
    %64 = vmatpush1.bf16.msra.mxu0 0
    %65 = vmatprep.subr.bf16.mxu0 0
    %66 = vmatpush1.bf16.msra.mxu0 0
    %67 = vmatprep.subr.bf16.mxu0 0
    %68 = vmatpush1.bf16.msra.mxu0 0
    %69 = vmatprep.subr.bf16.mxu0 0
    %70 = vmatpush1.bf16.msra.mxu0 0
    %71 = vmatprep.subr.bf16.mxu0 0
    %72 = vmatpush1.bf16.msra.mxu0 0
    %73 = vmatprep.subr.bf16.mxu0 0
    %74 = vmatpush1.bf16.msra.mxu0 0
    %75 = vmatprep.subr.bf16.mxu0 0
    %76 = vmatpush1.bf16.msra.mxu0 0
    %77 = vmatprep.subr.bf16.mxu0 0
    %78 = vmatpush1.bf16.msra.mxu0 0
    %79 = vmatprep.subr.bf16.mxu0 0
    %80 = vmatpush1.bf16.msra.mxu0 0
    %81 = vmatprep.subr.bf16.mxu0 0
    %82 = vmatpush1.bf16.msra.mxu0 0
    %83 = vmatprep.subr.bf16.mxu0 0
    %84 = vmatpush1.bf16.msra.mxu0 0
    %85 = vmatprep.mubr.bf16.mxu0 0
    %86 = vmatmul.mubr.bf16.gmra.mrb[0].mxu0 %v51
    %v87 = vpop.f32.mrb[0].mxu0
    %v88 = vadd.f32 0.0, %v87
    %v89 = vpop.f32.mrb[0].mxu0
    %v90 = vpop.f32.mrb[0].mxu0
    %v91 = vadd.f32 0.0, %v90
    %v92 = vpop.f32.mrb[0].mxu0
    %93 = vdwg.mxu0
    %v94 = vlaneseq
    %v95 = vshrl.u32 %v94, 7
    %v96 = vsub.s32 4, %v95
    %v97 = vrot.slane %v32, %v96
    %vm98 = vcmask 31744
    %v100 = vsel %vm98, %v88, 0
    %v103 = vsel %vm98, %v91, 0
    %vm105 = vcmask 1043456
    %v107 = vsel %vm105, %v32, 0
    %109 = vmatprep.subr.mxu0 0.0
    %110 = vmatpush1.msra.mxu0 %v107
    %111 = vmatprep.subr.mxu0 0.0
    %112 = vmatpush1.msra.mxu0 0.0
    %113 = vmatprep.subr.mxu0 0.0
    %114 = vmatpush1.msra.mxu0 0.0
    %115 = vmatprep.subr.mxu0 0.0
    %116 = vmatpush1.msra.mxu0 0.0
    %117 = vmatprep.subr.mxu0 0.0
    %118 = vmatpush1.msra.mxu0 0.0
    %119 = vmatprep.subr.mxu0 0.0
    %120 = vmatpush1.msra.mxu0 0.0
    %121 = vmatprep.subr.mxu0 0.0
    %122 = vmatpush1.msra.mxu0 0.0
    %123 = vmatprep.subr.mxu0 0.0
    %124 = vmatpush1.msra.mxu0 0.0
    %125 = vmatprep.subr.mxu0 0.0
    %126 = vmatpush1.msra.mxu0 0.0
    %127 = vmatprep.subr.mxu0 0.0
    %128 = vmatpush1.msra.mxu0 0.0
    %129 = vmatprep.subr.mxu0 0.0
    %130 = vmatpush1.msra.mxu0 0.0
    %131 = vmatprep.subr.mxu0 0.0
    %132 = vmatpush1.msra.mxu0 0.0
    %133 = vmatprep.subr.mxu0 0.0
    %134 = vmatpush1.msra.mxu0 0.0
    %135 = vmatprep.subr.mxu0 0.0
    %136 = vmatpush1.msra.mxu0 0.0
    %137 = vmatprep.subr.mxu0 0.0
    %138 = vmatpush1.msra.mxu0 0.0
    %139 = vmatprep.subr.mxu0 0.0
    %140 = vmatpush1.msra.mxu0 0.0
    %141 = vmatprep.subr.mxu0 0.0
    %142 = vmatpush1.msra.mxu0 0.0
    %143 = vmatprep.subr.mxu0 0.0
    %144 = vmatpush1.msra.mxu0 0.0
    %145 = vmatprep.subr.mxu0 0.0
    %146 = vmatpush1.msra.mxu0 0.0
    %147 = vmatprep.subr.mxu0 0.0
    %148 = vmatpush1.msra.mxu0 0.0
    %149 = vmatprep.subr.mxu0 0.0
    %150 = vmatpush1.msra.mxu0 0.0
    %151 = vmatprep.subr.mxu0 0.0
    %152 = vmatpush1.msra.mxu0 0.0
    %153 = vmatprep.subr.mxu0 0.0
    %154 = vmatpush1.msra.mxu0 0.0
    %155 = vmatprep.subr.mxu0 0.0
    %156 = vmatpush1.msra.mxu0 0.0
    %157 = vmatprep.subr.mxu0 0.0
    %158 = vmatpush1.msra.mxu0 0.0
    %159 = vmatprep.subr.mxu0 0.0
    %160 = vmatpush1.msra.mxu0 0.0
    %161 = vmatprep.subr.mxu0 0.0
    %162 = vmatpush1.msra.mxu0 0.0
    %163 = vmatprep.subr.mxu0 0.0
    %164 = vmatpush1.msra.mxu0 0.0
    %165 = vmatprep.subr.mxu0 0.0
    %166 = vmatpush1.msra.mxu0 0.0
    %167 = vmatprep.subr.mxu0 0.0
    %168 = vmatpush1.msra.mxu0 0.0
    %169 = vmatprep.subr.mxu0 0.0
    %170 = vmatpush1.msra.mxu0 0.0
    %171 = vmatprep.subr.mxu0 0.0
    %172 = vmatpush1.msra.mxu0 0.0
    %173 = vmatprep.mubr.f32.mxu0 0.0
    %174 = vmatmul.mubr.f32.gmra.mrb[0].mxu0 %v100
    %v175 = vpop.f32.mrb[0].mxu0
    %v176 = vadd.f32 %v97, %v175
    %v177 = vpop.f32.mrb[0].mxu0
    %178 = vmatprep.mubr.f32.mxu0 0.0
    %179 = vmatmul.mubr.f32.gmra.mrb[0].mxu0 %v103
    %v180 = vpop.f32.mrb[0].mxu0
    %v181 = vadd.f32 %v97, %v180
    %v182 = vpop.f32.mrb[0].mxu0
    %183 = vdwg.mxu0
    %v184 = vmax.f32 %v176, 0.0
    %v185 = vmax.f32 %v181, 0.0
    %v186 = vpack.c.bf16 %v185, %v184
    %187 = vmatprep.subr.bf16.mxu0 0
    %188 = vmatpush1.bf16.msra.mxu0 %v186
    %189 = vmatprep.subr.bf16.mxu0 0
    %190 = vmatpush1.bf16.msra.mxu0 0
    %191 = vmatprep.subr.bf16.mxu0 0
    %192 = vmatpush1.bf16.msra.mxu0 0
    %193 = vmatprep.subr.bf16.mxu0 0
    %194 = vmatpush1.bf16.msra.mxu0 0
    %195 = vmatprep.subr.bf16.mxu0 0
    %196 = vmatpush1.bf16.msra.mxu0 0
    %197 = vmatprep.subr.bf16.mxu0 0
    %198 = vmatpush1.bf16.msra.mxu0 0
    %199 = vmatprep.subr.bf16.mxu0 0
    %200 = vmatpush1.bf16.msra.mxu0 0
    %201 = vmatprep.subr.bf16.mxu0 0
    %202 = vmatpush1.bf16.msra.mxu0 0
    %203 = vmatprep.subr.bf16.mxu0 0
    %204 = vmatpush1.bf16.msra.mxu0 0
    %205 = vmatprep.subr.bf16.mxu0 0
    %206 = vmatpush1.bf16.msra.mxu0 0
    %207 = vmatprep.subr.bf16.mxu0 0
    %208 = vmatpush1.bf16.msra.mxu0 0
    %209 = vmatprep.subr.bf16.mxu0 0
    %210 = vmatpush1.bf16.msra.mxu0 0
    %211 = vmatprep.subr.bf16.mxu0 0
    %212 = vmatpush1.bf16.msra.mxu0 0
    %213 = vmatprep.subr.bf16.mxu0 0
    %214 = vmatpush1.bf16.msra.mxu0 0
    %215 = vmatprep.subr.bf16.mxu0 0
    %216 = vmatpush1.bf16.msra.mxu0 0
    %217 = vmatprep.subr.bf16.mxu0 0
    %218 = vmatpush1.bf16.msra.mxu0 0
    %219 = vmatprep.mubr.bf16.mxu0 0
    %220 = vmatmul.mubr.bf16.gmra.mrb[0].mxu0 %v51
    %v221 = vpop.f32.mrb[0].mxu0
    %v222 = vadd.f32 0.0, %v221
    %v223 = vpop.f32.mrb[0].mxu0
    %v224 = vpop.f32.mrb[0].mxu0
    %v225 = vadd.f32 0.0, %v224
    %v226 = vpop.f32.mrb[0].mxu0
    %227 = vdwg.mxu0
    %v228 = vlaneseq
    %v229 = vshrl.u32 %v228, 7
    %v230 = vsub.s32 5, %v229
    %v231 = vrot.slane %v36, %v230
    %vm236 = vcmask 1042432
    %v237 = vrot.slane %v32, 5
    %v238 = vrot.slane %v33, 5
    %v239 = vsel %vm236, %v237, %v238
    %v240 = vrot.slane %v34, 5
    %v241 = vsel %vm236, %v238, %v240
    %v242 = vrot.slane %v35, 5
    %v243 = vsel %vm236, %v240, %v242
    %v244 = vrot.slane %v36, 5
    %v245 = vsel %vm236, %v242, %v244
    %vm250 = vcmask 261120
    %v252 = vsel %vm250, %v222, 0
    %v255 = vsel %vm250, %v225, 0
    %257 = vmatprep.subr.mxu0 0.0
    %258 = vmatpush1.msra.mxu0 %v239
    %259 = vmatprep.subr.mxu0 0.0
    %260 = vmatpush1.msra.mxu0 %v241
    %261 = vmatprep.subr.mxu0 0.0
    %262 = vmatpush1.msra.mxu0 %v243
    %263 = vmatprep.subr.mxu0 0.0
    %264 = vmatpush1.msra.mxu0 %v245
    %265 = vmatprep.subr.mxu0 0.0
    %266 = vmatpush1.msra.mxu0 0.0
    %267 = vmatprep.subr.mxu0 0.0
    %268 = vmatpush1.msra.mxu0 0.0
    %269 = vmatprep.subr.mxu0 0.0
    %270 = vmatpush1.msra.mxu0 0.0
    %271 = vmatprep.subr.mxu0 0.0
    %272 = vmatpush1.msra.mxu0 0.0
    %273 = vmatprep.subr.mxu0 0.0
    %274 = vmatpush1.msra.mxu0 0.0
    %275 = vmatprep.subr.mxu0 0.0
    %276 = vmatpush1.msra.mxu0 0.0
    %277 = vmatprep.subr.mxu0 0.0
    %278 = vmatpush1.msra.mxu0 0.0
    %279 = vmatprep.subr.mxu0 0.0
    %280 = vmatpush1.msra.mxu0 0.0
    %281 = vmatprep.subr.mxu0 0.0
    %282 = vmatpush1.msra.mxu0 0.0
    %283 = vmatprep.subr.mxu0 0.0
    %284 = vmatpush1.msra.mxu0 0.0
    %285 = vmatprep.subr.mxu0 0.0
    %286 = vmatpush1.msra.mxu0 0.0
    %287 = vmatprep.subr.mxu0 0.0
    %288 = vmatpush1.msra.mxu0 0.0
    %289 = vmatprep.subr.mxu0 0.0
    %290 = vmatpush1.msra.mxu0 0.0
    %291 = vmatprep.subr.mxu0 0.0
    %292 = vmatpush1.msra.mxu0 0.0
    %293 = vmatprep.subr.mxu0 0.0
    %294 = vmatpush1.msra.mxu0 0.0
    %295 = vmatprep.subr.mxu0 0.0
    %296 = vmatpush1.msra.mxu0 0.0
    %297 = vmatprep.subr.mxu0 0.0
    %298 = vmatpush1.msra.mxu0 0.0
    %299 = vmatprep.subr.mxu0 0.0
    %300 = vmatpush1.msra.mxu0 0.0
    %301 = vmatprep.subr.mxu0 0.0
    %302 = vmatpush1.msra.mxu0 0.0
    %303 = vmatprep.subr.mxu0 0.0
    %304 = vmatpush1.msra.mxu0 0.0
    %305 = vmatprep.subr.mxu0 0.0
    %306 = vmatpush1.msra.mxu0 0.0
    %307 = vmatprep.subr.mxu0 0.0
    %308 = vmatpush1.msra.mxu0 0.0
    %309 = vmatprep.subr.mxu0 0.0
    %310 = vmatpush1.msra.mxu0 0.0
    %311 = vmatprep.subr.mxu0 0.0
    %312 = vmatpush1.msra.mxu0 0.0
    %313 = vmatprep.subr.mxu0 0.0
    %314 = vmatpush1.msra.mxu0 0.0
    %315 = vmatprep.subr.mxu0 0.0
    %316 = vmatpush1.msra.mxu0 0.0
    %317 = vmatprep.subr.mxu0 0.0
    %318 = vmatpush1.msra.mxu0 0.0
    %319 = vmatprep.subr.mxu0 0.0
    %320 = vmatpush1.msra.mxu0 0.0
    %321 = vmatprep.mubr.f32.mxu0 0.0
    %322 = vmatmul.mubr.f32.gmra.mrb[0].mxu0 %v252
    %v323 = vpop.f32.mrb[0].mxu0
    %v324 = vadd.f32 %v231, %v323
    %v325 = vpop.f32.mrb[0].mxu0
    %326 = vmatprep.mubr.f32.mxu0 0.0
    %327 = vmatmul.mubr.f32.gmra.mrb[0].mxu0 %v255
    %v328 = vpop.f32.mrb[0].mxu0
    %v329 = vadd.f32 %v231, %v328
    %v330 = vpop.f32.mrb[0].mxu0
    %331 = vdwg.mxu0
    %v332 = vmax.f32 %v324, 0.0
    %v333 = vmax.f32 %v329, 0.0
    %v334 = vunpack.c.l.bf16 %v30
    %v335 = vunpack.c.l.bf16 %v31
    %v336 = vsel %vm49, %v334, 0.0
    %v337 = vsel %vm49, %v335, 0.0
    %v338 = vadd.f32 %v336, %v337
    %v339 = vrot.slane %v338, 4
    %v340 = vadd.f32 %v338, %v339
    %v341 = vrot.slane %v340, 2
    %v342 = vadd.f32 %v340, %v341
    %v343 = vrot.slane %v342, 1
    %v344 = vadd.f32 %v342, %v343
    %v345 = vmul.f32 %v344, 0.0625
    %v347 = vsel %vm49, %v345, 0
    %349 = vmatprep.subr.mxu0 0.0
    %350 = vmatpush1.msra.mxu0 %v332
    %351 = vmatprep.subr.mxu0 0.0
    %352 = vmatpush1.msra.mxu0 %v333
    %353 = vmatprep.subr.mxu0 0.0
    %354 = vmatpush1.msra.mxu0 0.0
    %355 = vmatprep.subr.mxu0 0.0
    %356 = vmatpush1.msra.mxu0 0.0
    %357 = vmatprep.subr.mxu0 0.0
    %358 = vmatpush1.msra.mxu0 0.0
    %359 = vmatprep.subr.mxu0 0.0
    %360 = vmatpush1.msra.mxu0 0.0
    %361 = vmatprep.subr.mxu0 0.0
    %362 = vmatpush1.msra.mxu0 0.0
    %363 = vmatprep.subr.mxu0 0.0
    %364 = vmatpush1.msra.mxu0 0.0
    %365 = vmatprep.subr.mxu0 0.0
    %366 = vmatpush1.msra.mxu0 0.0
    %367 = vmatprep.subr.mxu0 0.0
    %368 = vmatpush1.msra.mxu0 0.0
    %369 = vmatprep.subr.mxu0 0.0
    %370 = vmatpush1.msra.mxu0 0.0
    %371 = vmatprep.subr.mxu0 0.0
    %372 = vmatpush1.msra.mxu0 0.0
    %373 = vmatprep.subr.mxu0 0.0
    %374 = vmatpush1.msra.mxu0 0.0
    %375 = vmatprep.subr.mxu0 0.0
    %376 = vmatpush1.msra.mxu0 0.0
    %377 = vmatprep.subr.mxu0 0.0
    %378 = vmatpush1.msra.mxu0 0.0
    %379 = vmatprep.subr.mxu0 0.0
    %380 = vmatpush1.msra.mxu0 0.0
    %381 = vmatprep.subr.mxu0 0.0
    %382 = vmatpush1.msra.mxu0 0.0
    %383 = vmatprep.subr.mxu0 0.0
    %384 = vmatpush1.msra.mxu0 0.0
    %385 = vmatprep.subr.mxu0 0.0
    %386 = vmatpush1.msra.mxu0 0.0
    %387 = vmatprep.subr.mxu0 0.0
    %388 = vmatpush1.msra.mxu0 0.0
    %389 = vmatprep.subr.mxu0 0.0
    %390 = vmatpush1.msra.mxu0 0.0
    %391 = vmatprep.subr.mxu0 0.0
    %392 = vmatpush1.msra.mxu0 0.0
    %393 = vmatprep.subr.mxu0 0.0
    %394 = vmatpush1.msra.mxu0 0.0
    %395 = vmatprep.subr.mxu0 0.0
    %396 = vmatpush1.msra.mxu0 0.0
    %397 = vmatprep.subr.mxu0 0.0
    %398 = vmatpush1.msra.mxu0 0.0
    %399 = vmatprep.subr.mxu0 0.0
    %400 = vmatpush1.msra.mxu0 0.0
    %401 = vmatprep.subr.mxu0 0.0
    %402 = vmatpush1.msra.mxu0 0.0
    %403 = vmatprep.subr.mxu0 0.0
    %404 = vmatpush1.msra.mxu0 0.0
    %405 = vmatprep.subr.mxu0 0.0
    %406 = vmatpush1.msra.mxu0 0.0
    %407 = vmatprep.subr.mxu0 0.0
    %408 = vmatpush1.msra.mxu0 0.0
    %409 = vmatprep.subr.mxu0 0.0
    %410 = vmatpush1.msra.mxu0 0.0
    %411 = vmatprep.subr.mxu0 0.0
    %412 = vmatpush1.msra.mxu0 0.0
    %413 = vmatprep.mubr.f32.mxu0 0.0
    %414 = vmatmul.mubr.f32.gmra.mrb[0].mxu0 %v347
    %v415 = vpop.f32.mrb[0].mxu0
    %v416 = vadd.f32 0.0, %v415
    %v417 = vpop.f32.mrb[0].mxu0
    %418 = vdwg.mxu0
    %vm423 = vcmask 1041408
    %v424 = vrot.slane %v36, 6
    %v425 = vrot.slane %v37, 6
    %v426 = vsel %vm423, %v424, %v425
    %v427 = vrot.slane %v38, 6
    %v428 = vsel %vm423, %v425, %v427
    %v429 = vrot.slane %v39, 6
    %v430 = vsel %vm423, %v427, %v429
    %v431 = vrot.slane %v40, 6
    %v432 = vsel %vm423, %v429, %v431
    %v439 = vsel %vm250, %v416, 0
    %441 = vmatprep.subr.mxu0 0.0
    %442 = vmatpush1.msra.mxu0 %v426
    %443 = vmatprep.subr.mxu0 0.0
    %444 = vmatpush1.msra.mxu0 %v428
    %445 = vmatprep.subr.mxu0 0.0
    %446 = vmatpush1.msra.mxu0 %v430
    %447 = vmatprep.subr.mxu0 0.0
    %448 = vmatpush1.msra.mxu0 %v432
    %449 = vmatprep.subr.mxu0 0.0
    %450 = vmatpush1.msra.mxu0 0.0
    %451 = vmatprep.subr.mxu0 0.0
    %452 = vmatpush1.msra.mxu0 0.0
    %453 = vmatprep.subr.mxu0 0.0
    %454 = vmatpush1.msra.mxu0 0.0
    %455 = vmatprep.subr.mxu0 0.0
    %456 = vmatpush1.msra.mxu0 0.0
    %457 = vmatprep.subr.mxu0 0.0
    %458 = vmatpush1.msra.mxu0 0.0
    %459 = vmatprep.subr.mxu0 0.0
    %460 = vmatpush1.msra.mxu0 0.0
    %461 = vmatprep.subr.mxu0 0.0
    %462 = vmatpush1.msra.mxu0 0.0
    %463 = vmatprep.subr.mxu0 0.0
    %464 = vmatpush1.msra.mxu0 0.0
    %465 = vmatprep.subr.mxu0 0.0
    %466 = vmatpush1.msra.mxu0 0.0
    %467 = vmatprep.subr.mxu0 0.0
    %468 = vmatpush1.msra.mxu0 0.0
    %469 = vmatprep.subr.mxu0 0.0
    %470 = vmatpush1.msra.mxu0 0.0
    %471 = vmatprep.subr.mxu0 0.0
    %472 = vmatpush1.msra.mxu0 0.0
    %473 = vmatprep.subr.mxu0 0.0
    %474 = vmatpush1.msra.mxu0 0.0
    %475 = vmatprep.subr.mxu0 0.0
    %476 = vmatpush1.msra.mxu0 0.0
    %477 = vmatprep.subr.mxu0 0.0
    %478 = vmatpush1.msra.mxu0 0.0
    %479 = vmatprep.subr.mxu0 0.0
    %480 = vmatpush1.msra.mxu0 0.0
    %481 = vmatprep.subr.mxu0 0.0
    %482 = vmatpush1.msra.mxu0 0.0
    %483 = vmatprep.subr.mxu0 0.0
    %484 = vmatpush1.msra.mxu0 0.0
    %485 = vmatprep.subr.mxu0 0.0
    %486 = vmatpush1.msra.mxu0 0.0
    %487 = vmatprep.subr.mxu0 0.0
    %488 = vmatpush1.msra.mxu0 0.0
    %489 = vmatprep.subr.mxu0 0.0
    %490 = vmatpush1.msra.mxu0 0.0
    %491 = vmatprep.subr.mxu0 0.0
    %492 = vmatpush1.msra.mxu0 0.0
    %493 = vmatprep.subr.mxu0 0.0
    %494 = vmatpush1.msra.mxu0 0.0
    %495 = vmatprep.subr.mxu0 0.0
    %496 = vmatpush1.msra.mxu0 0.0
    %497 = vmatprep.subr.mxu0 0.0
    %498 = vmatpush1.msra.mxu0 0.0
    %499 = vmatprep.subr.mxu0 0.0
    %500 = vmatpush1.msra.mxu0 0.0
    %501 = vmatprep.subr.mxu0 0.0
    %502 = vmatpush1.msra.mxu0 0.0
    %503 = vmatprep.subr.mxu0 0.0
    %504 = vmatpush1.msra.mxu0 0.0
    %505 = vmatprep.mubr.f32.mxu0 0.0
    %506 = vmatmul.mubr.f32.gmra.mrb[0].mxu0 %v439
    %v507 = vpop.f32.mrb[0].mxu0
    %v508 = vadd.f32 %v431, %v507
    %v509 = vpop.f32.mrb[0].mxu0
    %510 = vdwg.mxu0
    %vm511 = vcmask 0
    %512 = vst.msk [vmem:[#allocation5] sm:$0x1] %vm511, %v508
    // Predicated region
    $region18: #{gcn_forward.1} parent=1 // pred_check
      _
    $region19: #{gcn_forward.1} parent=1 // pred_check_branch
      %514 = sbr.rel (0) target = $region21
    $region20: #{gcn_forward.1} parent=1 // pred_region
      %s516 = ssub.s32 16, 16
      %517 = vsyncadd [#allocation4], %s516
      %s519 = sshll.u32 [#allocation5], 4
      %s520 = int_to_ptr.vmem [resolvable:$true] %s519
      %522 = dma.vmem_to_hbm [thread:$0]  %s520, 16, %s3, [#allocation4]
    $region21: #{gcn_forward.1} parent=1 // pred_fallthru
      _
    // Predicated region
    $region22: #{gcn_forward.1} parent=1 // pred_check
      _
    $region23: #{gcn_forward.1} parent=1 // pred_check_branch
      %524 = sbr.rel (0) target = $region25
    $region24: #{gcn_forward.1} parent=1 // pred_region
      %525 = dma.done [#allocation4], 16
    $region25: #{gcn_forward.1} parent=1 // pred_fallthru
      _
    %526 = vsyncpa [#allocation3], 1
    %527 = vsyncpa [#allocation4], 1

</llo_original>
